<compile_context>
chip_gen: v6e
topology: v6e:2x2x1
jax: 0.10.0
libtpu: 0.0.40
codegen_flags: <defaults>
</compile_context>

<pallas_src>
import jax
import jax.numpy as jnp
from jax.experimental import pallas as pl
from jax.experimental.pallas import tpu as pltpu


def _copy_kernel(x_ref, o_ref):
    # Straight lane-dense copy of one (TM, TN) tile (edges masked by Pallas).
    o_ref[...] = x_ref[...]


def _round_up(x: int, m: int) -> int:
    return ((x + m - 1) // m) * m


def _round_down(x: int, m: int) -> int:
    return (x // m) * m


def _min_sublane(dtype) -> int:
    """Sublane packing: 8 rows for 4-byte, 16 for 2-byte, 32 for 1-byte dtypes."""
    itemsize = jnp.dtype(dtype).itemsize
    return max(8, 32 // max(itemsize, 1))


def _chip_config():
    """Return (block_budget_bytes, vmem_limit_bytes) tuned per TPU generation."""
    try:
        vmem = getattr(pltpu.get_tpu_info(), "vmem_capacity_bytes", 128 << 20)
    except Exception:  # pragma: no cover - conservative fallback
        vmem = 128 << 20
    if vmem <= (64 << 20):
        # v7x-class: 64 MiB VMEM per TC. 4 MiB block * (2 in + 2 out buffers) = 16 MiB.
        return 4 << 20, 48 << 20
    # v5e/v6e: 128 MiB physical; raise the scoped limit above the 16/32 MiB default.
    return 8 << 20, 64 << 20


def _choose_block(n: int, flat: int, itemsize: int, budget_bytes: int, min_tm: int):
    """Pick (tm, tn): (min_tm, 128)-multiples (or full dims), ragged edges masked."""
    flat_pad = _round_up(flat, 128)
    max_elems = max(budget_bytes // itemsize, min_tm * 128)
    if min_tm * flat_pad <= max_elems:
        # Full-row tiles: each block is one contiguous HBM DMA.
        tn = flat  # equals the full lane dim -> valid even if flat % 128 != 0
        tm_cap = _round_down(max_elems // flat_pad, min_tm)
        tm = max(min_tm, min(tm_cap, _round_up(n, min_tm)))
    else:
        # Row too wide for the budget: split the lane dim into large 128-multiples.
        tm = min_tm
        tn = max(128, min(_round_down(max_elems // min_tm, 128), flat_pad))
    return tm, tn


def _ensure_two_blocks(n, flat, tm, tn, min_tm, total_bytes):
    """v7x has 2 TensorCores: keep >= 2 blocks on a parallel axis for big copies."""
    if total_bytes < (2 << 20):
        return tm, tn
    if pl.cdiv(n, tm) * pl.cdiv(flat, tn) >= 2:
        return tm, tn
    if n > min_tm:
        tm = _round_up(pl.cdiv(n, 2), min_tm)
    elif flat > 256:
        tn = min(tn, _round_up(pl.cdiv(flat, 2), 128))
    return tm, tn


def flatten(x: jax.Array, *, use_kernel: bool = True) -> jax.Array:
    """Pallas equivalent of torch `x.view(x.size(0), -1)`."""
    n = x.shape[0]
    flat = 1
    for d in x.shape[1:]:
        flat *= d

    # Metadata-only reshape: a contiguous tensor flattens with zero data movement.
    x2d = jnp.reshape(x, (n, flat))
    if not use_kernel or n == 0 or flat == 0:
        return x2d  # fast path: standalone flatten needs no copy at all

    itemsize = jnp.dtype(x.dtype).itemsize
    budget_bytes, vmem_limit = _chip_config()
    min_tm = _min_sublane(x.dtype)

    tm, tn = _choose_block(n, flat, itemsize, budget_bytes, min_tm)
    tm, tn = _ensure_two_blocks(n, flat, tm, tn, min_tm, n * flat * itemsize)

    grid = (pl.cdiv(n, tm), pl.cdiv(flat, tn))

    return pl.pallas_call(
        _copy_kernel,
        out_shape=jax.ShapeDtypeStruct((n, flat), x.dtype),
        grid_spec=pltpu.PrefetchScalarGridSpec(
            num_scalar_prefetch=0,
            grid=grid,
            in_specs=[pl.BlockSpec((tm, tn), lambda i, j: (i, j))],
            out_specs=pl.BlockSpec((tm, tn), lambda i, j: (i, j)),
        ),
        compiler_params=pltpu.CompilerParams(
            dimension_semantics=("parallel", "parallel"),
            vmem_limit_bytes=vmem_limit,
        ),
        cost_estimate=pl.CostEstimate(
            flops=0,
            transcendentals=0,
            bytes_accessed=2 * n * flat * itemsize,
        ),
        # Identity copy with identical index maps: let the output reuse the
        # input buffer when the caller donates it (XLA copies otherwise).
        input_output_aliases={0: 0},
    )(x2d)


if __name__ == "__main__":
    key = jax.random.PRNGKey(0)

    # Spec-consistent shape: conv feature map N=2, C=4, H=W=16.
    x = jax.random.normal(key, (2, 4, 16, 16), dtype=jnp.float32)
    out = flatten(x)
    jax.block_until_ready(out)
    ref = x.reshape(x.shape[0], -1)
    assert out.shape == (2, 4 * 16 * 16), out.shape
    assert out.dtype == x.dtype
    assert jnp.array_equal(out, ref), "Flatten kernel mismatch vs reference"

    # Ragged shape (n % 8 != 0, flat % 128 != 0) exercising the masked
    # partial-block path of the cdiv grid.
    key2 = jax.random.PRNGKey(1)
    y = jax.random.normal(key2, (3, 5, 7, 9), dtype=jnp.float32)
    out_y = flatten(y)
    jax.block_until_ready(out_y)
    assert out_y.shape == (3, 5 * 7 * 9)
    assert jnp.array_equal(out_y, y.reshape(3, -1)), "ragged Flatten mismatch"

    print("KERNEL_OK")
</pallas_src>

<mosaic_0001>
module attributes {stable_mosaic.version = 11 : i64} {
  func.func @_copy_kernel(%arg0: i32, %arg1: i32, %arg2: memref<8x1024xf32, #tpu.memory_space<vmem>>, %arg3: memref<8x1024xf32, #tpu.memory_space<vmem>>) attributes {dimension_semantics = [#tpu.dimension_semantics<parallel>, #tpu.dimension_semantics<parallel>], iteration_bounds = array<i64: 1, 1>, scalar_prefetch = 0 : i64, scratch_operands = 0 : i64, tpu.core_type = #tpu.core_type<tc>, window_params = [{transform_indices = @transform_0, window_bounds = array<i64: 8, 1024>}, {transform_indices = @transform_1, window_bounds = array<i64: 8, 1024>}]} {
    %c0 = arith.constant 0 : index
    %c0_0 = arith.constant 0 : index
    %0 = vector.load %arg2[%c0, %c0_0] : memref<8x1024xf32, #tpu.memory_space<vmem>>, vector<8x1024xf32>
    %c0_1 = arith.constant 0 : index
    %c0_2 = arith.constant 0 : index
    %1 = vector.load %arg3[%c0_1, %c0_2] : memref<8x1024xf32, #tpu.memory_space<vmem>>, vector<8x1024xf32>
    tpu.vector_store %arg3[%c0_1, %c0_2], %0 {strides = array<i32>} : memref<8x1024xf32, #tpu.memory_space<vmem>>, vector<8x1024xf32>,
    return
  }
  func.func @transform_0(%arg0: i32, %arg1: i32) -> (i32, i32) {
    %c0_i32 = arith.constant 0 : i32
    return %arg0, %arg1 : i32, i32
  }
  func.func @transform_1(%arg0: i32, %arg1: i32) -> (i32, i32) {
    %c0_i32 = arith.constant 0 : i32
    return %arg0, %arg1 : i32, i32
  }
}

</mosaic_0001>

<llo_original>
// kernel: tpu_custom_call.1
$region0: #{tpu_custom_call.1}
  #allocation0 [shape = 'u32[]', space=smem, size = 0x4, offset = 0x4, fixed_abs, tag = 'smem constant byte address 0x4 - core index']
  #allocation1 [shape = 'u32[144,128]{1,0:T(1,128)}', space=vmem, size = 0x12000, scoped, tag = 'internal scratch']
  %s0 = inlined_call_operand.hbm [shape: f32[2,1024], index: 0, kind: input, shape index: {}, may-alias: {0,1}]
  %s1 = inlined_call_operand.hbm [shape: f32[2,1024], index: 1, kind: output, shape index: {}, may-alias: {0,1}]
  %s2 = sld [smem:[#allocation0]]
  $region18: #{tpu_custom_call.1} parent=0
    _
  %s4 = ssub.s32 1, %s2
  %s5 = scalar_select 0, %s4, %s2
  $region1: #{tpu_custom_call.1} parent=0
    #allocation2 [shape = 'u8[32768]{0}', space=vmem, size = 0x8000, scoped, tag = 'input window, operand 0, single buffered']
    #allocation3 [shape = 's32[1]{0}', space=sflag, size = 0x4, scoped, tag = 'scoped memory for tpu_custom_call.1']
    #allocation4 [shape = 's32[1]{0}', space=sflag, size = 0x4, scoped, tag = 'scoped memory for tpu_custom_call.1']
    #allocation5 [shape = 'u8[32768]{0}', space=vmem, size = 0x8000, scoped, tag = 'output window, operand 0, single buffered']
    %6 = vsyncpa [#allocation3], 0
    %7 = vsyncpa [#allocation4], 0
    // Predicated region
    $region2: #{tpu_custom_call.1} parent=1 // pred_check
      _
    $region3: #{tpu_custom_call.1} parent=1 // pred_check_branch
      %9 = sbr.rel (0) target = $region5
    $region4: #{tpu_custom_call.1} parent=1 // pred_region
      %s11 = ssub.s32 1024, 256
      %12 = vsyncadd [#allocation3], %s11
      %s13 = sshll.u32 [#allocation2], 4
      %s14 = int_to_ptr.vmem [resolvable:$true] %s13
      %19 = dma.hbm_to_vmem [thread:$0]  %s0, 256, %s14, [#allocation3], 256, 256, 16
    $region5: #{tpu_custom_call.1} parent=1 // pred_fallthru
      _
    // Predicated region
    $region6: #{tpu_custom_call.1} parent=1 // pred_check
      _
    $region7: #{tpu_custom_call.1} parent=1 // pred_check_branch
      %21 = sbr.rel (0) target = $region9
    $region8: #{tpu_custom_call.1} parent=1 // pred_region
      %22 = dma.done [#allocation3], 1024
    $region9: #{tpu_custom_call.1} parent=1 // pred_fallthru
      _
    %v23 = vld [vmem:[#allocation2] sm:$0xff]
    %v24 = vld [vmem:[#allocation2 + $0x8] sm:$0xff]
    %v25 = vld [vmem:[#allocation2 + $0x10] sm:$0xff]
    %v26 = vld [vmem:[#allocation2 + $0x18] sm:$0xff]
    %v27 = vld [vmem:[#allocation2 + $0x20] sm:$0xff]
    %v28 = vld [vmem:[#allocation2 + $0x28] sm:$0xff]
    %v29 = vld [vmem:[#allocation2 + $0x30] sm:$0xff]
    %v30 = vld [vmem:[#allocation2 + $0x38] sm:$0xff]
    %31 = vst [vmem:[#allocation5] sm:$0xff] %v23
    %32 = vst [vmem:[#allocation5 + $0x8] sm:$0xff] %v24
    %33 = vst [vmem:[#allocation5 + $0x10] sm:$0xff] %v25
    %34 = vst [vmem:[#allocation5 + $0x18] sm:$0xff] %v26
    %35 = vst [vmem:[#allocation5 + $0x20] sm:$0xff] %v27
    %36 = vst [vmem:[#allocation5 + $0x28] sm:$0xff] %v28
    %37 = vst [vmem:[#allocation5 + $0x30] sm:$0xff] %v29
    %38 = vst [vmem:[#allocation5 + $0x38] sm:$0xff] %v30
    // Predicated region
    $region10: #{tpu_custom_call.1} parent=1 // pred_check
      _
    $region11: #{tpu_custom_call.1} parent=1 // pred_check_branch
      %40 = sbr.rel (0) target = $region13
    $region12: #{tpu_custom_call.1} parent=1 // pred_region
      %s42 = ssub.s32 1024, 256
      %43 = vsyncadd [#allocation4], %s42
      %s44 = sshll.u32 [#allocation5], 4
      %s45 = int_to_ptr.vmem [resolvable:$true] %s44
      %50 = dma.vmem_to_hbm [thread:$0]  %s45, 256, %s1, [#allocation4], 256, 256, 16
    $region13: #{tpu_custom_call.1} parent=1 // pred_fallthru
      _
    // Predicated region
    $region14: #{tpu_custom_call.1} parent=1 // pred_check
      _
    $region15: #{tpu_custom_call.1} parent=1 // pred_check_branch
      %52 = sbr.rel (0) target = $region17
    $region16: #{tpu_custom_call.1} parent=1 // pred_region
      %53 = dma.done [#allocation4], 1024
    $region17: #{tpu_custom_call.1} parent=1 // pred_fallthru
      _
    %54 = vsyncpa [#allocation3], 1
    %55 = vsyncpa [#allocation4], 1

</llo_original>
